<compile_context>
chip_gen: v7x
topology: tpu7x:2x2x1
jax: 0.10.0
libtpu: 0.0.40
codegen_flags: <defaults>
</compile_context>

<pallas_src>
import jax
import jax.numpy as jnp
from jax.experimental import pallas as pl
from jax.experimental.pallas import tpu as pltpu


def mlp_kernel(x_ref, w1_ref, b1_ref, w2_ref, b2_ref, o_ref):
    # Fused hot path: matmul (MXU) -> bias + ReLU (f32 VPU) -> matmul (MXU) -> bias.
    x = x_ref[...]
    h = jnp.dot(x, w1_ref[...], preferred_element_type=jnp.float32)
    h = jnp.maximum(h + b1_ref[...], 0.0)          # bias/ReLU in f32 (v5e-safe)
    out = jnp.dot(h.astype(w2_ref.dtype), w2_ref[...],
                  preferred_element_type=jnp.float32)
    out = out + b2_ref[...]
    o_ref[...] = out.astype(o_ref.dtype)


def _round_up(n, m):
    return ((n + m - 1) // m) * m


def prepare_params(w1, b1, w2, b2, *, compute_dtype=jnp.bfloat16):
    """One-time weight preprocessing (NOT in the per-call forward path).

    * w1: (input_size, hidden), b1: (1, hidden), w2: (hidden, num_classes),
      b2: (1, num_classes)  (i.e. already transposed vs PyTorch layout).
    * Hidden dim is zero-padded up to a multiple of 128 (exact through
      bias/ReLU/matmul) so h is lane-dense and the second matmul's
      contraction dim is a full 128.
    * Matmul operands are cast to `compute_dtype` (bf16 by default);
      biases stay f32 so bias-add / ReLU run on the f32 VPU path.
    """
    K, H = w1.shape
    C = w2.shape[1]
    H_pad = _round_up(H, 128)
    if H_pad != H:
        w1 = jnp.zeros((K, H_pad), w1.dtype).at[:, :H].set(w1)
        b1 = jnp.zeros((1, H_pad), b1.dtype).at[:, :H].set(b1)
        w2 = jnp.zeros((H_pad, C), w2.dtype).at[:H, :].set(w2)
    return (w1.astype(compute_dtype), b1.astype(jnp.float32),
            w2.astype(compute_dtype), b2.astype(jnp.float32))


def simple_classification_net(x, w1, b1, w2, b2, *, block_b=2048):
    """x: (B, input_size); params from prepare_params() -> (B, num_classes)."""
    B, K = x.shape
    H_pad = w1.shape[1]
    C = w2.shape[1]
    assert w1.shape[0] == K and b1.shape == (1, H_pad)
    assert w2.shape[0] == H_pad and b2.shape == (1, C)
    if x.dtype != w1.dtype:
        x = x.astype(w1.dtype)          # keep matmul operand dtypes consistent

    # ---- Batch tile --------------------------------------------------------
    # Biggest tile that amortizes the ~600-cycle per-grid-step overhead, but:
    #   * multiple of 8 sublanes,
    #   * >= 2 grid tiles when the batch allows it, so the "parallel" batch
    #     axis shards across both TensorCores on v7x.
    block_b = max(8, _round_up(block_b, 8))
    TB = min(block_b, _round_up(B, 8))
    if B > 8:
        TB = min(TB, _round_up(pl.cdiv(B, 2), 8))
    grid = (pl.cdiv(B, TB),)            # ragged last tile is masked by Pallas

    out_dtype = x.dtype

    # ---- Explicit scoped-VMEM budget (v5e default is only 16 MiB) ----------
    vmem_bytes = (
        2 * TB * K * x.dtype.itemsize                     # double-buffered x tiles
        + 2 * TB * C * jnp.dtype(out_dtype).itemsize      # double-buffered out tiles
        + 2 * (K * H_pad + H_pad * C) * w1.dtype.itemsize # resident weights (2 bufs)
        + 2 * (H_pad + C) * 4                             # resident biases (f32)
        + TB * (H_pad + C) * 4                            # in-kernel f32 intermediates
    )
    vmem_limit = int(min(max(2 * vmem_bytes + (8 << 20), 16 << 20), 64 << 20))

    # NOTE: weight/bias BlockSpecs use a constant index_map so they stay
    # VMEM-resident across all batch tiles.  When K/H grow large on v7x,
    # pipeline_mode=pl.Buffered(1) on these specs would halve their resident
    # footprint; at 32x128x8 (~66 KiB) it is irrelevant, so it is omitted.
    # TODO(synk): if input_size reaches several K, add a trailing "arbitrary"
    # K-axis over w1's rows with a (TB, H_pad) f32 accumulator scratch
    # (pl.when init/finalize) so the w1 tile fits v7x's 64 MiB VMEM.
    out = pl.pallas_call(
        mlp_kernel,
        out_shape=jax.ShapeDtypeStruct((B, C), out_dtype),
        grid_spec=pl.GridSpec(
            grid=grid,
            in_specs=[
                pl.BlockSpec((TB, K), lambda i: (i, 0)),       # batch-tiled x
                pl.BlockSpec((K, H_pad), lambda i: (0, 0)),    # VMEM-resident w1
                pl.BlockSpec((1, H_pad), lambda i: (0, 0)),    # VMEM-resident b1
                pl.BlockSpec((H_pad, C), lambda i: (0, 0)),    # VMEM-resident w2
                pl.BlockSpec((1, C), lambda i: (0, 0)),        # VMEM-resident b2
            ],
            out_specs=pl.BlockSpec((TB, C), lambda i: (i, 0)),
        ),
        compiler_params=pltpu.CompilerParams(
            # Batch tiles are independent -> shard across TCs on v7x megacore.
            dimension_semantics=("parallel",),
            vmem_limit_bytes=vmem_limit),
    )(x, w1, b1, w2, b2)

    return out


def init_params(key, input_size, hidden_size, num_classes, dtype=jnp.float32):
    """Deterministic PyTorch-style (uniform +-1/sqrt(fan_in)) initialization."""
    k1, k2, k3, k4 = jax.random.split(key, 4)
    lim1 = 1.0 / (input_size ** 0.5)
    lim2 = 1.0 / (hidden_size ** 0.5)
    w1 = jax.random.uniform(k1, (input_size, hidden_size), dtype, -lim1, lim1)
    b1 = jax.random.uniform(k2, (1, hidden_size), dtype, -lim1, lim1)
    w2 = jax.random.uniform(k3, (hidden_size, num_classes), dtype, -lim2, lim2)
    b2 = jax.random.uniform(k4, (1, num_classes), dtype, -lim2, lim2)
    return w1, b1, w2, b2


if __name__ == "__main__":
    input_size, hidden_size, num_classes = 32, 64, 8
    batch = 20   # not a multiple of 8 nor of the tile -> exercises ragged last tile

    key = jax.random.PRNGKey(0)
    kx, kp = jax.random.split(key)
    x = jax.random.normal(kx, (batch, input_size), jnp.float32)
    w1, b1, w2, b2 = init_params(kp, input_size, hidden_size, num_classes)

    # Plain-JAX f32 reference (exact semantics of the PyTorch module).
    ref = jnp.maximum(x @ w1 + b1, 0.0) @ w2 + b2

    # --- f32 path: exact check (hidden-dim zero padding is numerically exact)
    p32 = prepare_params(w1, b1, w2, b2, compute_dtype=jnp.float32)
    out32 = jax.block_until_ready(simple_classification_net(x, *p32))
    assert out32.shape == (batch, num_classes)
    assert jnp.allclose(out32, ref, atol=1e-5, rtol=1e-5)

    # --- bf16 path (default for perf): wider tolerance for bf16 matmul inputs
    pbf = prepare_params(w1, b1, w2, b2)              # bf16 matmul operands
    xb = x.astype(jnp.bfloat16)                       # cast once, outside hot path
    outbf = jax.block_until_ready(simple_classification_net(xb, *pbf))
    assert outbf.shape == (batch, num_classes)
    assert jnp.allclose(outbf.astype(jnp.float32), ref, atol=5e-2, rtol=5e-2)

    print("KERNEL_OK")
</pallas_src>

<mosaic_0001>
module attributes {stable_mosaic.version = 11 : i64} {
  func.func @mlp_kernel(%arg0: i32, %arg1: memref<16x32xf32, #tpu.memory_space<vmem>>, %arg2: memref<32x128xf32, #tpu.memory_space<vmem>>, %arg3: memref<1x128xf32, #tpu.memory_space<vmem>>, %arg4: memref<128x8xf32, #tpu.memory_space<vmem>>, %arg5: memref<1x8xf32, #tpu.memory_space<vmem>>, %arg6: memref<16x8xf32, #tpu.memory_space<vmem>>) attributes {dimension_semantics = [#tpu.dimension_semantics<parallel>], iteration_bounds = array<i64: 2>, scalar_prefetch = 0 : i64, scratch_operands = 0 : i64, tpu.core_type = #tpu.core_type<tc>, window_params = [{transform_indices = @transform_0, window_bounds = array<i64: 16, 32>}, {pipeline_mode = #tpu.pipeline_mode<synchronous>, transform_indices = @transform_1, window_bounds = array<i64: 32, 128>}, {pipeline_mode = #tpu.pipeline_mode<synchronous>, transform_indices = @transform_2, window_bounds = array<i64: 1, 128>}, {pipeline_mode = #tpu.pipeline_mode<synchronous>, transform_indices = @transform_3, window_bounds = array<i64: 128, 8>}, {pipeline_mode = #tpu.pipeline_mode<synchronous>, transform_indices = @transform_4, window_bounds = array<i64: 1, 8>}, {transform_indices = @transform_5, window_bounds = array<i64: 16, 8>}]} {
    %c0 = arith.constant 0 : index
    %c0_0 = arith.constant 0 : index
    %0 = vector.load %arg1[%c0, %c0_0] : memref<16x32xf32, #tpu.memory_space<vmem>>, vector<16x32xf32>
    %c0_1 = arith.constant 0 : index
    %c0_2 = arith.constant 0 : index
    %1 = vector.load %arg2[%c0_1, %c0_2] : memref<32x128xf32, #tpu.memory_space<vmem>>, vector<32x128xf32>
    %cst = arith.constant dense<0.000000e+00> : vector<16x128xf32>
    %2 = tpu.matmul %0, %1, %cst {dimension_numbers = #tpu.dot_dimension_numbers<[1], [0], [0], [1], [0, 0, 1, 1], [], []>} : vector<16x32xf32>, vector<32x128xf32>, vector<16x128xf32> -> vector<16x128xf32>
    %c0_3 = arith.constant 0 : index
    %c0_4 = arith.constant 0 : index
    %3 = vector.load %arg3[%c0_3, %c0_4] : memref<1x128xf32, #tpu.memory_space<vmem>>, vector<1x128xf32>
    %4 = vector.broadcast %3 : vector<1x128xf32> to vector<16x128xf32>
    %5 = arith.addf %2, %4 : vector<16x128xf32>
    %cst_5 = arith.constant 0.000000e+00 : f32
    %6 = vector.broadcast %cst_5 : f32 to vector<16x128xf32>
    %7 = arith.maximumf %5, %6 : vector<16x128xf32>
    %c0_6 = arith.constant 0 : index
    %c0_7 = arith.constant 0 : index
    %8 = vector.load %arg4[%c0_6, %c0_7] : memref<128x8xf32, #tpu.memory_space<vmem>>, vector<128x8xf32>
    %cst_8 = arith.constant dense<0.000000e+00> : vector<16x8xf32>
    %9 = tpu.matmul %7, %8, %cst_8 {dimension_numbers = #tpu.dot_dimension_numbers<[1], [0], [0], [1], [0, 0, 1, 1], [], []>} : vector<16x128xf32>, vector<128x8xf32>, vector<16x8xf32> -> vector<16x8xf32>
    %c0_9 = arith.constant 0 : index
    %c0_10 = arith.constant 0 : index
    %10 = vector.load %arg5[%c0_9, %c0_10] : memref<1x8xf32, #tpu.memory_space<vmem>>, vector<1x8xf32>
    %11 = vector.broadcast %10 : vector<1x8xf32> to vector<16x8xf32>
    %12 = arith.addf %9, %11 : vector<16x8xf32>
    %c0_11 = arith.constant 0 : index
    %c0_12 = arith.constant 0 : index
    %13 = vector.load %arg6[%c0_11, %c0_12] : memref<16x8xf32, #tpu.memory_space<vmem>>, vector<16x8xf32>
    tpu.vector_store %arg6[%c0_11, %c0_12], %12 {strides = array<i32>} : memref<16x8xf32, #tpu.memory_space<vmem>>, vector<16x8xf32>,
    return
  }
  func.func @transform_0(%arg0: i32) -> (i32, i32) {
    %c0_i32 = arith.constant 0 : i32
    %c0_i32_0 = arith.constant 0 : i32
    return %arg0, %c0_i32 : i32, i32
  }
  func.func @transform_1(%arg0: i32) -> (i32, i32) {
    %c0_i32 = arith.constant 0 : i32
    %c0_i32_0 = arith.constant 0 : i32
    %c0_i32_1 = arith.constant 0 : i32
    return %c0_i32, %c0_i32_0 : i32, i32
  }
  func.func @transform_2(%arg0: i32) -> (i32, i32) {
    %c0_i32 = arith.constant 0 : i32
    %c0_i32_0 = arith.constant 0 : i32
    %c0_i32_1 = arith.constant 0 : i32
    return %c0_i32, %c0_i32_0 : i32, i32
  }
  func.func @transform_3(%arg0: i32) -> (i32, i32) {
    %c0_i32 = arith.constant 0 : i32
    %c0_i32_0 = arith.constant 0 : i32
    %c0_i32_1 = arith.constant 0 : i32
    return %c0_i32, %c0_i32_0 : i32, i32
  }
  func.func @transform_4(%arg0: i32) -> (i32, i32) {
    %c0_i32 = arith.constant 0 : i32
    %c0_i32_0 = arith.constant 0 : i32
    %c0_i32_1 = arith.constant 0 : i32
    return %c0_i32, %c0_i32_0 : i32, i32
  }
  func.func @transform_5(%arg0: i32) -> (i32, i32) {
    %c0_i32 = arith.constant 0 : i32
    %c0_i32_0 = arith.constant 0 : i32
    return %arg0, %c0_i32 : i32, i32
  }
}

</mosaic_0001>

<llo_original>
// kernel: tpu_custom_call.1
$region0: #{tpu_custom_call.1}
  #allocation0 [shape = 'u32[]', space=smem, size = 0x4, offset = 0x4, fixed_abs, tag = 'smem constant byte address 0x4 - core index']
  #allocation1 [shape = 'u32[144,128]{1,0:T(1,128)}', space=vmem, size = 0x12000, scoped, tag = 'internal scratch']
  %s0 = inlined_call_operand.vmem [shape: f32[20,32], index: 0, kind: input, shape index: {}]
  %s1 = inlined_call_operand.vmem [shape: f32[32,128], index: 1, kind: input, shape index: {}]
  %s2 = inlined_call_operand.vmem [shape: f32[1,128], index: 2, kind: input, shape index: {}]
  %s3 = inlined_call_operand.vmem [shape: f32[128,8], index: 3, kind: input, shape index: {}]
  %s4 = inlined_call_operand.vmem [shape: f32[1,8], index: 4, kind: input, shape index: {}]
  %s5 = inlined_call_operand.vmem [shape: f32[20,8], index: 5, kind: output, shape index: {}]
  %s6 = sld [smem:[#allocation0]]
  $region101: #{tpu_custom_call.1} parent=0
    _
  %s8 = ssub.s32 1, %s6
  %s9 = scalar_select 0, %s8, %s6
  $region1: #{tpu_custom_call.1} parent=0
    #allocation2 [shape = 'u8[16384]{0}', space=vmem, size = 0x4000, scoped, tag = 'output window, operand 0']
    loop: start=0, step=1, limit=4
    $region2: #{tpu_custom_call.1} parent=1 // loop_pre_header
      _
    $region3: #{tpu_custom_call.1} parent=1 // loop_header
      %s11 = sphi 0, %s15
      %p12 = scmp.ge.s32.totalorder %s11, 4
      %s21 = sphi 0, %s23
      %s24 = sphi 0, %s21
      %s25 = sphi 0, %s24
      %s41 = sphi 0, %s25
      %s45 = sphi 0, %s45
      %s47 = sphi 0, %s45
      %s48 = sphi 0, %s47
      %s62 = sphi 0, %s48
      %s66 = sphi 0, %s66
      %s68 = sphi 0, %s66
      %s69 = sphi 0, %s68
      %s83 = sphi 0, %s69
      %s87 = sphi 0, %s87
      %s89 = sphi 0, %s87
      %s90 = sphi 0, %s89
      %s104 = sphi 0, %s90
      %s108 = sphi 0, %s108
      %s110 = sphi 0, %s108
      %s111 = sphi 0, %s110
      %s125 = sphi 0, %s111
      %s131 = sphi 0, %s133
      %s134 = sphi 0, %s131
      %s135 = sphi 0, %s134
      %s151 = sphi 0, %s135
    $region4: #{tpu_custom_call.1} parent=1 // loop_header_branch
      %14 = sbr.rel (%p12) target = $region8
    $region5: #{tpu_custom_call.1} parent=1 // loop_body
      %s16 = ssub.s32 %s11, 1
      %s17 = ssub.s32 %s11, 2
      %s18 = sadd.s32 %s11, 1
      %s19 = ssub.s32 %s11, %s18
      %p20 = scmp.eq.s32.totalorder %s19, 0
      %s22 = sadd.s32 %s21, 1
      %s23 = scalar_select %p20, %s21, %s22
      %p26 = pneg %p20
      %p27 = scmp.eq.s32.totalorder %s11, 1
      %p28 = por %p26, %p27
      %p29 = scmp.ne.s32.totalorder %s21, %s24
      %p30 = scmp.eq.s32.totalorder %s11, 0
      %p31 = por %p29, %p30
      %p32 = scmp.ne.s32.totalorder %s21, %s24
      %p33 = scmp.eq.s32.totalorder %s16, 1
      %p34 = por %p32, %p33
      %p35 = scmp.ne.s32.totalorder %s24, %s25
      %p36 = scmp.eq.s32.totalorder %s16, 0
      %p37 = por %p35, %p36
      %p38 = scmp.ne.s32.totalorder %s24, %s25
      %p39 = scmp.eq.s32.totalorder %s17, 1
      %p40 = por %p38, %p39
      %p42 = scmp.ne.s32.totalorder %s25, %s41
      %p43 = scmp.eq.s32.totalorder %s17, 0
      %p44 = por %p42, %p43
      %s46 = sadd.s32 %s45, 1
      %p49 = scmp.eq.s32.totalorder %s11, 1
      %p50 = scmp.ne.s32.totalorder %s45, %s47
      %p51 = scmp.eq.s32.totalorder %s11, 0
      %p52 = por %p50, %p51
      %p53 = scmp.ne.s32.totalorder %s45, %s47
      %p54 = scmp.eq.s32.totalorder %s16, 1
      %p55 = por %p53, %p54
      %p56 = scmp.ne.s32.totalorder %s47, %s48
      %p57 = scmp.eq.s32.totalorder %s16, 0
      %p58 = por %p56, %p57
      %p59 = scmp.ne.s32.totalorder %s47, %s48
      %p60 = scmp.eq.s32.totalorder %s17, 1
      %p61 = por %p59, %p60
      %p63 = scmp.ne.s32.totalorder %s48, %s62
      %p64 = scmp.eq.s32.totalorder %s17, 0
      %p65 = por %p63, %p64
      %s67 = sadd.s32 %s66, 1
      %p70 = scmp.eq.s32.totalorder %s11, 1
      %p71 = scmp.ne.s32.totalorder %s66, %s68
      %p72 = scmp.eq.s32.totalorder %s11, 0
      %p73 = por %p71, %p72
      %p74 = scmp.ne.s32.totalorder %s66, %s68
      %p75 = scmp.eq.s32.totalorder %s16, 1
      %p76 = por %p74, %p75
      %p77 = scmp.ne.s32.totalorder %s68, %s69
      %p78 = scmp.eq.s32.totalorder %s16, 0
      %p79 = por %p77, %p78
      %p80 = scmp.ne.s32.totalorder %s68, %s69
      %p81 = scmp.eq.s32.totalorder %s17, 1
      %p82 = por %p80, %p81
      %p84 = scmp.ne.s32.totalorder %s69, %s83
      %p85 = scmp.eq.s32.totalorder %s17, 0
      %p86 = por %p84, %p85
      %s88 = sadd.s32 %s87, 1
      %p91 = scmp.eq.s32.totalorder %s11, 1
      %p92 = scmp.ne.s32.totalorder %s87, %s89
      %p93 = scmp.eq.s32.totalorder %s11, 0
      %p94 = por %p92, %p93
      %p95 = scmp.ne.s32.totalorder %s87, %s89
      %p96 = scmp.eq.s32.totalorder %s16, 1
      %p97 = por %p95, %p96
      %p98 = scmp.ne.s32.totalorder %s89, %s90
      %p99 = scmp.eq.s32.totalorder %s16, 0
      %p100 = por %p98, %p99
      %p101 = scmp.ne.s32.totalorder %s89, %s90
      %p102 = scmp.eq.s32.totalorder %s17, 1
      %p103 = por %p101, %p102
      %p105 = scmp.ne.s32.totalorder %s90, %s104
      %p106 = scmp.eq.s32.totalorder %s17, 0
      %p107 = por %p105, %p106
      %s109 = sadd.s32 %s108, 1
      %p112 = scmp.eq.s32.totalorder %s11, 1
      %p113 = scmp.ne.s32.totalorder %s108, %s110
      %p114 = scmp.eq.s32.totalorder %s11, 0
      %p115 = por %p113, %p114
      %p116 = scmp.ne.s32.totalorder %s108, %s110
      %p117 = scmp.eq.s32.totalorder %s16, 1
      %p118 = por %p116, %p117
      %p119 = scmp.ne.s32.totalorder %s110, %s111
      %p120 = scmp.eq.s32.totalorder %s16, 0
      %p121 = por %p119, %p120
      %p122 = scmp.ne.s32.totalorder %s110, %s111
      %p123 = scmp.eq.s32.totalorder %s17, 1
      %p124 = por %p122, %p123
      %p126 = scmp.ne.s32.totalorder %s111, %s125
      %p127 = scmp.eq.s32.totalorder %s17, 0
      %p128 = por %p126, %p127
      %s129 = ssub.s32 %s11, %s18
      %p130 = scmp.eq.s32.totalorder %s129, 0
      %s132 = sadd.s32 %s131, 1
      %s133 = scalar_select %p130, %s131, %s132
      %p136 = pneg %p130
      %p137 = scmp.eq.s32.totalorder %s11, 1
      %p138 = por %p136, %p137
      %p139 = scmp.ne.s32.totalorder %s131, %s134
      %p140 = scmp.eq.s32.totalorder %s11, 0
      %p141 = por %p139, %p140
      %p142 = scmp.ne.s32.totalorder %s131, %s134
      %p143 = scmp.eq.s32.totalorder %s16, 1
      %p144 = por %p142, %p143
      %p145 = scmp.ne.s32.totalorder %s134, %s135
      %p146 = scmp.eq.s32.totalorder %s16, 0
      %p147 = por %p145, %p146
      %p148 = scmp.ne.s32.totalorder %s134, %s135
      %p149 = scmp.eq.s32.totalorder %s17, 1
      %p150 = por %p148, %p149
      %p152 = scmp.ne.s32.totalorder %s135, %s151
      %p153 = scmp.eq.s32.totalorder %s17, 0
      %p154 = por %p152, %p153
      %p155 = scmp.le.s32.totalorder 1, %s11
      %p156 = scmp.lt.s32.totalorder %s11, 3
      %p157 = pnand %p155, %p156
      %p158 = pneg %p157
      // Predicated region
      $region9: #{tpu_custom_call.1} parent=5 // pred_check
        _
      $region10: #{tpu_custom_call.1} parent=5 // pred_check_branch
        %160 = sbr.rel (%p157) target = $region12
      $region11: #{tpu_custom_call.1} parent=5 // pred_region
        %s161 = ssub.s32 %s11, 1
        // Predicated region
        $region13: #{tpu_custom_call.1} parent=11 // pred_check
          %p162 = pneg %p58
        $region14: #{tpu_custom_call.1} parent=11 // pred_check_branch
          %164 = sbr.rel (%p162) target = $region16
        $region15: #{tpu_custom_call.1} parent=11 // pred_region
          _
        $region16: #{tpu_custom_call.1} parent=11 // pred_fallthru
          _
        // Predicated region
        $region17: #{tpu_custom_call.1} parent=11 // pred_check
          %p165 = pneg %p79
        $region18: #{tpu_custom_call.1} parent=11 // pred_check_branch
          %167 = sbr.rel (%p165) target = $region20
        $region19: #{tpu_custom_call.1} parent=11 // pred_region
          _
        $region20: #{tpu_custom_call.1} parent=11 // pred_fallthru
          _
        // Predicated region
        $region21: #{tpu_custom_call.1} parent=11 // pred_check
          %p168 = pneg %p100
        $region22: #{tpu_custom_call.1} parent=11 // pred_check_branch
          %170 = sbr.rel (%p168) target = $region24
        $region23: #{tpu_custom_call.1} parent=11 // pred_region
          _
        $region24: #{tpu_custom_call.1} parent=11 // pred_fallthru
          _
        // Predicated region
        $region25: #{tpu_custom_call.1} parent=11 // pred_check
          %p171 = pneg %p121
        $region26: #{tpu_custom_call.1} parent=11 // pred_check_branch
          %173 = sbr.rel (%p171) target = $region28
        $region27: #{tpu_custom_call.1} parent=11 // pred_region
          _
        $region28: #{tpu_custom_call.1} parent=11 // pred_fallthru
          _
      $region12: #{tpu_custom_call.1} parent=5 // pred_fallthru
        _
      %p174 = scmp.lt.s32.totalorder %s11, 2
      // Predicated region
      $region29: #{tpu_custom_call.1} parent=5 // pred_check
        %p175 = pneg %p174
      $region30: #{tpu_custom_call.1} parent=5 // pred_check_branch
        %177 = sbr.rel (%p175) target = $region32
      $region31: #{tpu_custom_call.1} parent=5 // pred_region
        // Predicated region
        $region33: #{tpu_custom_call.1} parent=31 // pred_check
          %p178 = pneg %p31
        $region34: #{tpu_custom_call.1} parent=31 // pred_check_branch
          %180 = sbr.rel (%p178) target = $region36
        $region35: #{tpu_custom_call.1} parent=31 // pred_region
          %s181 = smul.u32 2, %s11
          %s182 = ssub.s32 3, %s181
          %p183 = scmp.lt.s32.totalorder %s182, 2
          %s184 = scalar_select %p183, %s182, 2
          %s185 = smul.u32 128, %s184
          %p186 = scmp.lt.s32.totalorder %s181, 2
          %s187 = scalar_select %p186, %s181, 2
          %s188 = smul.addr %s187, 8
          %s189 = scalar_lea.vmem %s0, %s188
          %s190 = smul.u32 2, %s11
          %s191 = ssub.s32 3, %s190
          %p192 = scmp.lt.s32.totalorder %s191, 2
          %s193 = scalar_select %p192, %s191, 2
          %s194 = smul.u32 128, %s193
        $region36: #{tpu_custom_call.1} parent=31 // pred_fallthru
          _
      $region32: #{tpu_custom_call.1} parent=5 // pred_fallthru
        _
      %p195 = scmp.le.s32.totalorder 1, %s11
      %p196 = scmp.lt.s32.totalorder %s11, 3
      %p197 = pnand %p195, %p196
      %p198 = pneg %p197
      // Predicated region
      $region37: #{tpu_custom_call.1} parent=5 // pred_check
        _
      $region38: #{tpu_custom_call.1} parent=5 // pred_check_branch
        %200 = sbr.rel (%p197) target = $region40
      $region39: #{tpu_custom_call.1} parent=5 // pred_region
        %s201 = ssub.s32 %s11, 1
        %s202 = smul.u32 2, %s16
        %s203 = ssub.s32 3, %s202
        %p204 = scmp.lt.s32.totalorder %s203, 2
        %s205 = scalar_select %p204, %s203, 2
        %s206 = smul.u32 128, %s205
        %p207 = scmp.lt.s32.totalorder %s202, 2
        %s208 = scalar_select %p207, %s202, 2
        %s209 = smul.addr %s208, 8
        %s210 = scalar_lea.vmem %s0, %s209
        %p211 = pneg %p37
        %p212 = pneg %p34
        %p213 = pneg %p58
        %p214 = pneg %p55
        %p215 = pneg %p79
        %p216 = pneg %p76
        %p217 = pneg %p100
        %p218 = pneg %p97
        %p219 = pneg %p121
        %p220 = pneg %p118
        %p221 = pneg %p147
        %p222 = pneg %p144
        %s223 = sand.u32 %s134, 1
        %s224 = sand.u32 %s134, 1
        %s225 = smul.addr %s224, 16
        %s226 = scalar_lea.vmem [#allocation2], %s225
        %s227 = smul.u32 2, %s16
        %s228 = ssub.s32 3, %s227
        %p229 = scmp.lt.s32.totalorder %s228, 2
        %s230 = scalar_select %p229, %s228, 2
        %s231 = smul.u32 128, %s230
        %p232 = scmp.lt.s32.totalorder %s227, 2
        %s233 = scalar_select %p232, %s227, 2
        %s234 = smul.addr %s233, 8
        %s235 = scalar_lea.vmem %s0, %s234
        %s236 = smul.u32 2, %s16
        %s237 = ssub.s32 3, %s236
        %p238 = scmp.lt.s32.totalorder %s237, 2
        %s239 = scalar_select %p238, %s237, 2
        %s240 = smul.u32 128, %s239
        %s241 = smul.u32 2, %s16
        %s242 = ssub.s32 3, %s241
        %p243 = scmp.lt.s32.totalorder %s242, 2
        %s244 = scalar_select %p243, %s242, 2
        %s245 = smul.u32 128, %s244
        %v246 = vld [vmem:[%s235] sm:$0xff]
        %v247 = vld [vmem:[%s235 + $0x8] sm:$0xff]
        %v248 = vld [vmem:[%s1] sm:$0xff]
        %v249 = vld [vmem:[%s1 + $0x8] sm:$0xff]
        %v250 = vld [vmem:[%s1 + $0x10] sm:$0xff]
        %v251 = vld [vmem:[%s1 + $0x18] sm:$0xff]
        %v252 = vld [vmem:[%s2] sm:$0x1]
        %v254 = vlaneseq
        %v255 = vshrl.u32 %v254, 7
        %v256 = vsub.s32 0, %v255
        %v257 = vrot.slane %v252, %v256
        %vm259 = vcmask 261120
        %v261 = vsel %vm259, %v246, 0
        %v264 = vsel %vm259, %v247, 0
        %266 = vmatprep.subr.mxu0 0.0
        %267 = vmatpush1.msra.mxu0 %v248
        %268 = vmatprep.subr.mxu0 0.0
        %269 = vmatpush1.msra.mxu0 %v249
        %270 = vmatprep.subr.mxu0 0.0
        %271 = vmatpush1.msra.mxu0 %v250
        %272 = vmatprep.subr.mxu0 0.0
        %273 = vmatpush1.msra.mxu0 %v251
        %274 = vmatprep.subr.mxu0 0.0
        %275 = vmatpush1.msra.mxu0 0.0
        %276 = vmatprep.subr.mxu0 0.0
        %277 = vmatpush1.msra.mxu0 0.0
        %278 = vmatprep.subr.mxu0 0.0
        %279 = vmatpush1.msra.mxu0 0.0
        %280 = vmatprep.subr.mxu0 0.0
        %281 = vmatpush1.msra.mxu0 0.0
        %282 = vmatprep.subr.mxu0 0.0
        %283 = vmatpush1.msra.mxu0 0.0
        %284 = vmatprep.subr.mxu0 0.0
        %285 = vmatpush1.msra.mxu0 0.0
        %286 = vmatprep.subr.mxu0 0.0
        %287 = vmatpush1.msra.mxu0 0.0
        %288 = vmatprep.subr.mxu0 0.0
        %289 = vmatpush1.msra.mxu0 0.0
        %290 = vmatprep.subr.mxu0 0.0
        %291 = vmatpush1.msra.mxu0 0.0
        %292 = vmatprep.subr.mxu0 0.0
        %293 = vmatpush1.msra.mxu0 0.0
        %294 = vmatprep.subr.mxu0 0.0
        %295 = vmatpush1.msra.mxu0 0.0
        %296 = vmatprep.subr.mxu0 0.0
        %297 = vmatpush1.msra.mxu0 0.0
        %298 = vmatprep.subr.mxu0 0.0
        %299 = vmatpush1.msra.mxu0 0.0
        %300 = vmatprep.subr.mxu0 0.0
        %301 = vmatpush1.msra.mxu0 0.0
        %302 = vmatprep.subr.mxu0 0.0
        %303 = vmatpush1.msra.mxu0 0.0
        %304 = vmatprep.subr.mxu0 0.0
        %305 = vmatpush1.msra.mxu0 0.0
        %306 = vmatprep.subr.mxu0 0.0
        %307 = vmatpush1.msra.mxu0 0.0
        %308 = vmatprep.subr.mxu0 0.0
        %309 = vmatpush1.msra.mxu0 0.0
        %310 = vmatprep.subr.mxu0 0.0
        %311 = vmatpush1.msra.mxu0 0.0
        %312 = vmatprep.subr.mxu0 0.0
        %313 = vmatpush1.msra.mxu0 0.0
        %314 = vmatprep.subr.mxu0 0.0
        %315 = vmatpush1.msra.mxu0 0.0
        %316 = vmatprep.subr.mxu0 0.0
        %317 = vmatpush1.msra.mxu0 0.0
        %318 = vmatprep.subr.mxu0 0.0
        %319 = vmatpush1.msra.mxu0 0.0
        %320 = vmatprep.subr.mxu0 0.0
        %321 = vmatpush1.msra.mxu0 0.0
        %322 = vmatprep.subr.mxu0 0.0
        %323 = vmatpush1.msra.mxu0 0.0
        %324 = vmatprep.subr.mxu0 0.0
        %325 = vmatpush1.msra.mxu0 0.0
        %326 = vmatprep.subr.mxu0 0.0
        %327 = vmatpush1.msra.mxu0 0.0
        %328 = vmatprep.subr.mxu0 0.0
        %329 = vmatpush1.msra.mxu0 0.0
        %330 = vmatprep.mubr.f32.mxu0 0.0
        %331 = vmatmul.mubr.f32.gmra.mrb[0].mxu0 %v261
        %v332 = vpop.f32.mrb[0].mxu0
        %v333 = vadd.f32 %v257, %v332
        %v334 = vpop.f32.mrb[0].mxu0
        %335 = vmatprep.mubr.f32.mxu0 0.0
        %336 = vmatmul.mubr.f32.gmra.mrb[0].mxu0 %v264
        %v337 = vpop.f32.mrb[0].mxu0
        %v338 = vadd.f32 %v257, %v337
        %v339 = vpop.f32.mrb[0].mxu0
        %340 = vdwg.mxu0
        %v341 = vmax.f32 %v333, 0.0
        %v342 = vmax.f32 %v338, 0.0
        %v343 = vld [vmem:[%s3] sm:$0xff]
        %v344 = vld [vmem:[%s3 + $0x8] sm:$0xff]
        %v345 = vld [vmem:[%s3 + $0x10] sm:$0xff]
        %v346 = vld [vmem:[%s3 + $0x18] sm:$0xff]
        %v347 = vld [vmem:[%s3 + $0x20] sm:$0xff]
        %v348 = vld [vmem:[%s3 + $0x28] sm:$0xff]
        %v349 = vld [vmem:[%s3 + $0x30] sm:$0xff]
        %v350 = vld [vmem:[%s3 + $0x38] sm:$0xff]
        %v351 = vld [vmem:[%s3 + $0x40] sm:$0xff]
        %v352 = vld [vmem:[%s3 + $0x48] sm:$0xff]
        %v353 = vld [vmem:[%s3 + $0x50] sm:$0xff]
        %v354 = vld [vmem:[%s3 + $0x58] sm:$0xff]
        %v355 = vld [vmem:[%s3 + $0x60] sm:$0xff]
        %v356 = vld [vmem:[%s3 + $0x68] sm:$0xff]
        %v357 = vld [vmem:[%s3 + $0x70] sm:$0xff]
        %v358 = vld [vmem:[%s3 + $0x78] sm:$0xff]
        %v359 = vld [vmem:[%s4] sm:$0x1]
        %v361 = vlaneseq
        %v362 = vshrl.u32 %v361, 7
        %v363 = vsub.s32 0, %v362
        %v364 = vrot.slane %v359, %v363
        %366 = vmatprep.subr.mxu0 0.0
        %367 = vmatpush1.msra.mxu0 %v343
        %368 = vmatprep.subr.mxu0 0.0
        %369 = vmatpush1.msra.mxu0 %v344
        %370 = vmatprep.subr.mxu0 0.0
        %371 = vmatpush1.msra.mxu0 %v345
        %372 = vmatprep.subr.mxu0 0.0
        %373 = vmatpush1.msra.mxu0 %v346
        %374 = vmatprep.subr.mxu0 0.0
        %375 = vmatpush1.msra.mxu0 %v347
        %376 = vmatprep.subr.mxu0 0.0
        %377 = vmatpush1.msra.mxu0 %v348
        %378 = vmatprep.subr.mxu0 0.0
        %379 = vmatpush1.msra.mxu0 %v349
        %380 = vmatprep.subr.mxu0 0.0
        %381 = vmatpush1.msra.mxu0 %v350
        %382 = vmatprep.subr.mxu0 0.0
        %383 = vmatpush1.msra.mxu0 %v351
        %384 = vmatprep.subr.mxu0 0.0
        %385 = vmatpush1.msra.mxu0 %v352
        %386 = vmatprep.subr.mxu0 0.0
        %387 = vmatpush1.msra.mxu0 %v353
        %388 = vmatprep.subr.mxu0 0.0
        %389 = vmatpush1.msra.mxu0 %v354
        %390 = vmatprep.subr.mxu0 0.0
        %391 = vmatpush1.msra.mxu0 %v355
        %392 = vmatprep.subr.mxu0 0.0
        %393 = vmatpush1.msra.mxu0 %v356
        %394 = vmatprep.subr.mxu0 0.0
        %395 = vmatpush1.msra.mxu0 %v357
        %396 = vmatprep.subr.mxu0 0.0
        %397 = vmatpush1.msra.mxu0 %v358
        %398 = vmatprep.subr.mxu0 0.0
        %399 = vmatpush1.msra.mxu0 0.0
        %400 = vmatprep.subr.mxu0 0.0
        %401 = vmatpush1.msra.mxu0 0.0
        %402 = vmatprep.subr.mxu0 0.0
        %403 = vmatpush1.msra.mxu0 0.0
        %404 = vmatprep.subr.mxu0 0.0
        %405 = vmatpush1.msra.mxu0 0.0
        %406 = vmatprep.subr.mxu0 0.0
        %407 = vmatpush1.msra.mxu0 0.0
        %408 = vmatprep.subr.mxu0 0.0
        %409 = vmatpush1.msra.mxu0 0.0
        %410 = vmatprep.subr.mxu0 0.0
        %411 = vmatpush1.msra.mxu0 0.0
        %412 = vmatprep.subr.mxu0 0.0
        %413 = vmatpush1.msra.mxu0 0.0
        %414 = vmatprep.subr.mxu0 0.0
        %415 = vmatpush1.msra.mxu0 0.0
        %416 = vmatprep.subr.mxu0 0.0
        %417 = vmatpush1.msra.mxu0 0.0
        %418 = vmatprep.subr.mxu0 0.0
        %419 = vmatpush1.msra.mxu0 0.0
        %420 = vmatprep.subr.mxu0 0.0
        %421 = vmatpush1.msra.mxu0 0.0
        %422 = vmatprep.subr.mxu0 0.0
        %423 = vmatpush1.msra.mxu0 0.0
        %424 = vmatprep.subr.mxu0 0.0
        %425 = vmatpush1.msra.mxu0 0.0
        %426 = vmatprep.subr.mxu0 0.0
        %427 = vmatpush1.msra.mxu0 0.0
        %428 = vmatprep.subr.mxu0 0.0
        %429 = vmatpush1.msra.mxu0 0.0
        %430 = vmatprep.mubr.f32.mxu0 0.0
        %431 = vmatmul.mubr.f32.gmra.mrb[0].mxu0 %v341
        %v432 = vpop.f32.mrb[0].mxu0
        %v433 = vadd.f32 %v364, %v432
        %v434 = vpop.f32.mrb[0].mxu0
        %435 = vmatprep.mubr.f32.mxu0 0.0
        %436 = vmatmul.mubr.f32.gmra.mrb[0].mxu0 %v342
        %v437 = vpop.f32.mrb[0].mxu0
        %v438 = vadd.f32 %v364, %v437
        %v439 = vpop.f32.mrb[0].mxu0
        %440 = vdwg.mxu0
        %vm441 = vcmask 64512
        %442 = vst.msk [vmem:[%s226] sm:$0xff] %vm441, %v433
        %443 = vst.msk [vmem:[%s226 + $0x8] sm:$0xff] %vm441, %v438
        %s444 = sand.u32 %s134, 1
        %s445 = sand.u32 %s134, 1
        %s446 = smul.addr %s445, 16
        %s447 = scalar_lea.vmem [#allocation2], %s446
        // Predicated region
        $region41: #{tpu_custom_call.1} parent=39 // pred_check
          %p448 = pneg %p144
        $region42: #{tpu_custom_call.1} parent=39 // pred_check_branch
          %450 = sbr.rel (%p448) target = $region44
        $region43: #{tpu_custom_call.1} parent=39 // pred_region
          %s451 = smul.u32 2, %s16
          %s452 = ssub.s32 3, %s451
          %p453 = scmp.lt.s32.totalorder %s452, 2
          %s454 = scalar_select %p453, %s452, 2
          %s455 = smul.u32 128, %s454
          %p456 = scmp.ne.s32.totalorder 0, %s455
          %s457 = smul.addr %s451, 8
          %s458 = scalar_lea.vmem %s5, %s457
          // Predicated region
          $region45: #{tpu_custom_call.1} parent=43 // pred_check
            %p459 = pneg %p456
          $region46: #{tpu_custom_call.1} parent=43 // pred_check_branch
            %461 = sbr.rel (%p459) target = $region48
          $region47: #{tpu_custom_call.1} parent=43 // pred_region
            // Predicated region
            $region49: #{tpu_custom_call.1} parent=47 // pred_check
              _
            $region50: #{tpu_custom_call.1} parent=47 // pred_check_branch
              %463 = sbr.rel (0) target = $region52
            $region51: #{tpu_custom_call.1} parent=47 // pred_region
              // Predicated region
              $region71: #{tpu_custom_call.1} parent=51 // pred_check
                _
              $region72: #{tpu_custom_call.1} parent=51 // pred_check_branch
                %514 = sbr.rel (0) target = $region74
              $region73: #{tpu_custom_call.1} parent=51 // pred_region
                %s515 = sshrl.u32 %s454, 1
                // While loop
                $region75: #{tpu_custom_call.1} parent=73 // loop_pre_header
                  _
                $region76: #{tpu_custom_call.1} parent=73 // loop_header
                  %s517 = sphi 0, %s519
                  %p518 = scmp.ge.s32.totalorder %s517, %s515
                  %s522 = sphi 0, %s531
                  %s523 = sphi %s447, %s534
                  %s524 = sphi %s458, %s535
                $region77: #{tpu_custom_call.1} parent=73 // loop_header_branch
                  %521 = sbr.rel (%p518) target = $region81
                $region78: #{tpu_custom_call.1} parent=73 // loop_body
                  %v525 = vld [vmem:[%s523] sm:$0xff]
                  %526 = vst [vmem:[%s524] sm:$0xff] %v525
                  %v527 = vld [vmem:[%s523 + $0x8] sm:$0xff]
                  %528 = vst [vmem:[%s524 + $0x8] sm:$0xff] %v527
                  %s529 = sadd.s32 1, %s522
                  %p530 = scmp.ge.s32.totalorder %s529, %s515
                  %s531 = scalar_select %p530, 0, %s529
                  %s532 = smul.u32 %s531, 16
                  %s533 = smul.u32 %s531, 16
                  %s534 = scalar_lea.vmem %s447, %s532 [#allocation2]
                  %s535 = scalar_lea.vmem %s458, %s533
                $region79: #{tpu_custom_call.1} parent=73 // loop_footer
                  %s519 = sadd.s32 %s517, 1
                $region80: #{tpu_custom_call.1} parent=73 // loop_footer_branch
                  %516 = sbr.rel target = $region76
                $region81: #{tpu_custom_call.1} parent=73 // loop_exit
                  _
                %s536 = sshrl.u32 %s454, 1
                %s537 = sand.u32 %s454, 1
                %s538 = smul.u32 %s536, 2
                %s539 = smul.u32 8, %s538
                %s540 = scalar_lea.vmem %s447, %s539 [#allocation2]
                %s541 = smul.u32 8, %s538
                %s542 = scalar_lea.vmem %s458, %s541
                // While loop
                $region82: #{tpu_custom_call.1} parent=73 // loop_pre_header
                  _
                $region83: #{tpu_custom_call.1} parent=73 // loop_header
                  %s544 = sphi 0, %s546
                  %p545 = scmp.ge.s32.totalorder %s544, %s537
                  %s549 = sphi 0, %s556
                  %s550 = sphi %s540, %s559
                  %s551 = sphi %s542, %s560
                $region84: #{tpu_custom_call.1} parent=73 // loop_header_branch
                  %548 = sbr.rel (%p545) target = $region88
                $region85: #{tpu_custom_call.1} parent=73 // loop_body
                  %v552 = vld [vmem:[%s550] sm:$0xff]
                  %553 = vst [vmem:[%s551] sm:$0xff] %v552
                  %s554 = sadd.s32 1, %s549
                  %p555 = scmp.ge.s32.totalorder %s554, %s537
                  %s556 = scalar_select %p555, 0, %s554
                  %s557 = smul.u32 %s556, 8
                  %s558 = smul.u32 %s556, 8
                  %s559 = scalar_lea.vmem %s540, %s557 [#allocation2]
                  %s560 = scalar_lea.vmem %s542, %s558
                $region86: #{tpu_custom_call.1} parent=73 // loop_footer
                  %s546 = sadd.s32 %s544, 1
                $region87: #{tpu_custom_call.1} parent=73 // loop_footer_branch
                  %543 = sbr.rel target = $region83
                $region88: #{tpu_custom_call.1} parent=73 // loop_exit
                  _
              $region74: #{tpu_custom_call.1} parent=51 // pred_fallthru
                _
              // Predicated region
              $region89: #{tpu_custom_call.1} parent=51 // pred_check
                _
              $region90: #{tpu_custom_call.1} parent=51 // pred_check_branch
                %562 = sbr.rel target = $region92
              $region91: #{tpu_custom_call.1} parent=51 // pred_region
                _
              $region92: #{tpu_custom_call.1} parent=51 // pred_fallthru
                _
            $region52: #{tpu_custom_call.1} parent=47 // pred_fallthru
              _
            // Predicated region
            $region53: #{tpu_custom_call.1} parent=47 // pred_check
              _
            $region54: #{tpu_custom_call.1} parent=47 // pred_check_branch
              %465 = sbr.rel target = $region56
            $region55: #{tpu_custom_call.1} parent=47 // pred_region
              %s467 = sshrl.u32 %s454, 1
              // While loop
              $region57: #{tpu_custom_call.1} parent=55 // loop_pre_header
                _
              $region58: #{tpu_custom_call.1} parent=55 // loop_header
                %s469 = sphi 0, %s471
                %p470 = scmp.ge.s32.totalorder %s469, %s467
                %s474 = sphi 0, %s483
                %s475 = sphi %s447, %s486
                %s476 = sphi %s458, %s487
              $region59: #{tpu_custom_call.1} parent=55 // loop_header_branch
                %473 = sbr.rel (%p470) target = $region63
              $region60: #{tpu_custom_call.1} parent=55 // loop_body
                %v477 = vld [vmem:[%s475] sm:$0xff]
                %478 = vst [vmem:[%s476] sm:$0xff] %v477
                %v479 = vld [vmem:[%s475 + $0x8] sm:$0xff]
                %480 = vst [vmem:[%s476 + $0x8] sm:$0xff] %v479
                %s481 = sadd.s32 1, %s474
                %p482 = scmp.ge.s32.totalorder %s481, %s467
                %s483 = scalar_select %p482, 0, %s481
                %s484 = smul.u32 %s483, 16
                %s485 = smul.u32 %s483, 16
                %s486 = scalar_lea.vmem %s447, %s484 [#allocation2]
                %s487 = scalar_lea.vmem %s458, %s485
              $region61: #{tpu_custom_call.1} parent=55 // loop_footer
                %s471 = sadd.s32 %s469, 1
              $region62: #{tpu_custom_call.1} parent=55 // loop_footer_branch
                %468 = sbr.rel target = $region58
              $region63: #{tpu_custom_call.1} parent=55 // loop_exit
                _
              %s488 = sshrl.u32 %s454, 1
              %s489 = sand.u32 %s454, 1
              %s490 = smul.u32 %s488, 2
              %s491 = smul.u32 8, %s490
              %s492 = scalar_lea.vmem %s447, %s491 [#allocation2]
              %s493 = smul.u32 8, %s490
              %s494 = scalar_lea.vmem %s458, %s493
              // While loop
              $region64: #{tpu_custom_call.1} parent=55 // loop_pre_header
                _
              $region65: #{tpu_custom_call.1} parent=55 // loop_header
                %s496 = sphi 0, %s498
                %p497 = scmp.ge.s32.totalorder %s496, %s489
                %s501 = sphi 0, %s508
                %s502 = sphi %s492, %s511
                %s503 = sphi %s494, %s512
              $region66: #{tpu_custom_call.1} parent=55 // loop_header_branch
                %500 = sbr.rel (%p497) target = $region70
              $region67: #{tpu_custom_call.1} parent=55 // loop_body
                %v504 = vld [vmem:[%s502] sm:$0xff]
                %505 = vst [vmem:[%s503] sm:$0xff] %v504
                %s506 = sadd.s32 1, %s501
                %p507 = scmp.ge.s32.totalorder %s506, %s489
                %s508 = scalar_select %p507, 0, %s506
                %s509 = smul.u32 %s508, 8
                %s510 = smul.u32 %s508, 8
                %s511 = scalar_lea.vmem %s492, %s509 [#allocation2]
                %s512 = scalar_lea.vmem %s494, %s510
              $region68: #{tpu_custom_call.1} parent=55 // loop_footer
                %s498 = sadd.s32 %s496, 1
              $region69: #{tpu_custom_call.1} parent=55 // loop_footer_branch
                %495 = sbr.rel target = $region65
              $region70: #{tpu_custom_call.1} parent=55 // loop_exit
                _
            $region56: #{tpu_custom_call.1} parent=47 // pred_fallthru
              _
          $region48: #{tpu_custom_call.1} parent=43 // pred_fallthru
            _
          %563 = vnop
        $region44: #{tpu_custom_call.1} parent=39 // pred_fallthru
          _
      $region40: #{tpu_custom_call.1} parent=5 // pred_fallthru
        _
      %p564 = scmp.le.s32.totalorder 2, %s11
      // Predicated region
      $region93: #{tpu_custom_call.1} parent=5 // pred_check
        %p565 = pneg %p564
      $region94: #{tpu_custom_call.1} parent=5 // pred_check_branch
        %567 = sbr.rel (%p565) target = $region96
      $region95: #{tpu_custom_call.1} parent=5 // pred_region
        %s568 = ssub.s32 %s11, 2
        // Predicated region
        $region97: #{tpu_custom_call.1} parent=95 // pred_check
          %p569 = pneg %p150
        $region98: #{tpu_custom_call.1} parent=95 // pred_check_branch
          %571 = sbr.rel (%p569) target = $region100
        $region99: #{tpu_custom_call.1} parent=95 // pred_region
          %s572 = sand.u32 %s135, 1
          %s573 = sand.u32 %s135, 1
          %s574 = smul.addr %s573, 16
          %s575 = scalar_lea.vmem [#allocation2], %s574
        $region100: #{tpu_custom_call.1} parent=95 // pred_fallthru
          _
      $region96: #{tpu_custom_call.1} parent=5 // pred_fallthru
        _
    $region6: #{tpu_custom_call.1} parent=1 // loop_footer
      %s15 = sadd.s32 1, %s11
    $region7: #{tpu_custom_call.1} parent=1 // loop_footer_branch
      %10 = sbr.rel target = $region3
    $region8: #{tpu_custom_call.1} parent=1 // loop_exit
      _

</llo_original>
